<compile_context>
chip_gen: v7x
topology: tpu7x:2x2x1
jax: 0.10.0
libtpu: 0.0.40
codegen_flags: <defaults>
</compile_context>

<pallas_src>
import numpy as np
import jax
import jax.numpy as jnp
from jax import lax
from jax.experimental import pallas as pl
from jax.experimental.pallas import tpu as pltpu

INV_SQRT2 = 0.7071067811865476


# ----------------------------------------------------------------------------
# Kernel
# ----------------------------------------------------------------------------
def quantum_encoder_kernel(
    x_ref,       # [TB, D]       batch tile of inputs (real feature width, no pad)
    w1_ref,      # [D, H2p]      W1 with BN1 scale folded into columns
    s1_ref,      # [1, H2p]      fused shift: b1*bn1_s + bn1_t
    w2_ref,      # [H2p, Lp]     W2 with (BN2 scale * freq) folded into columns
    s2bm_ref,    # [2, Lp]       row 0: fused shift2 (b2,bn2,freq,phase), row 1: bm
    wm_ref,      # [Lp, Lp]      fused measurement: Wm + 0.5 * ent @ Wm
    out_ref,     # [TB, Lp]
):
    mxu_dtype = w1_ref.dtype  # fp32 (exact) or bf16 (fast MXU path)

    # Layer 1: Linear + folded BatchNorm, exact (erf) GELU.  fp32 accumulation.
    h = jnp.dot(x_ref[...], w1_ref[...], preferred_element_type=jnp.float32)
    h = h + s1_ref[...]
    h = 0.5 * h * (1.0 + lax.erf(h * INV_SQRT2))
    # Dropout(0.1): identity in eval mode.

    # Layer 2: Linear + folded (BatchNorm * freq) + phase, then phase encoding.
    t = jnp.dot(h.astype(mxu_dtype), w2_ref[...], preferred_element_type=jnp.float32)
    p = jnp.sin(t + s2bm_ref[0:1, :])
    # amplitude_component = cos(...) is unused by the torch forward -> skipped.

    # Fused entanglement + measurement projection, then tanh.
    q = jnp.dot(p.astype(mxu_dtype), wm_ref[...], preferred_element_type=jnp.float32)
    out_ref[...] = jnp.tanh(q + s2bm_ref[1:2, :])


# ----------------------------------------------------------------------------
# Sizing helpers
# ----------------------------------------------------------------------------
def _round_up(v, m):
    return ((v + m - 1) // m) * m


def _cdiv(a, b):
    return -(-a // b)


def _vmem_caps():
    """(tile budget, vmem_limit cap) derived from the chip's physical VMEM."""
    try:
        cap = int(pltpu.get_tpu_info().vmem_capacity_bytes)
    except Exception:  # non-TPU / older API: assume the smallest (v7x, 64 MiB)
        cap = 64 << 20
    limit = min((cap * 3) // 4, 100 << 20)   # ~48 MiB on v7x, ~96 MiB on v5e/v6e
    return limit // 2, limit


def _vmem_estimate_bytes(tb, d_in, h2p, lp):
    # fp32-conservative (bf16 path uses less).
    acts = 2 * 4 * tb * (d_in + lp)                                  # x/out, double-buffered
    weights = 4 * (d_in * h2p + h2p + h2p * lp + 2 * lp + lp * lp)   # resident operands
    scratch = 4 * tb * (h2p + 2 * lp)                                # h / p / q intermediates
    return acts + 2 * weights + scratch                              # x2 weights: conservative


def _pick_batch_tile(batch, d_in, h2p, lp, budget_bytes):
    """Largest tile (<=2048) fitting the VMEM budget; >=2 even grid steps when
    batch >= 16 so v7x's two TensorCores both get work."""
    tb = max(min(2048, _round_up(batch, 8)), 8)
    while tb > 8 and _vmem_estimate_bytes(tb, d_in, h2p, lp) > budget_bytes:
        tb = max(_round_up(tb // 2, 8), 8)
    n_steps = _cdiv(batch, tb)
    if batch >= 16:
        if n_steps < 2:
            n_steps = 2
        elif n_steps % 2:
            n_steps += 1
        tb = max(_round_up(_cdiv(batch, n_steps), 8), 8)
    return tb


# ----------------------------------------------------------------------------
# One-time parameter folding / padding (hoisted out of the per-call path)
# ----------------------------------------------------------------------------
def prepare_quantum_encoder_params(params, *, mxu_dtype=jnp.float32, eps=1e-5):
    """Fold BN / bias / freq / phase / entanglement into the weights, pad the
    output-feature dims to multiples of 128, and upload once.  Done on the host
    in float64 so the algebraic reassociation does not drift vs the reference
    even with trained BN stats."""
    p = {k: np.asarray(v, dtype=np.float64) for k, v in params.items()}
    d_in, h2 = p["w1"].shape
    latent = p["w2"].shape[1]
    h2p = _round_up(h2, 128)
    lp = _round_up(latent, 128)

    s1 = p["bn1_gamma"] / np.sqrt(p["bn1_var"] + eps)
    t1 = p["bn1_beta"] - p["bn1_mean"] * s1
    s2 = p["bn2_gamma"] / np.sqrt(p["bn2_var"] + eps)
    t2 = p["bn2_beta"] - p["bn2_mean"] * s2

    # Layer 1: (x@W1 + b1)*s1 + t1  ->  x@(W1*s1) + (b1*s1 + t1)
    w1f = p["w1"] * s1[None, :]
    shift1 = p["b1"] * s1 + t1
    # Layer 2 + phase: ((h@W2+b2)*s2+t2)*freq+phase -> h@(W2*s2*freq) + shift2
    sf = s2 * p["freq"]
    w2f = p["w2"] * sf[None, :]
    shift2 = p["b2"] * sf + t2 * p["freq"] + p["phase"]
    # Entanglement + measurement: (p + 0.5*p@ent)@Wm + bm = p@(Wm+0.5*ent@Wm)+bm
    wmf = p["wm"] + 0.5 * (p["ent"] @ p["wm"])

    # Pad only the OUTPUT-feature dims (lane-dense MXU tiles / unmasked stores).
    # The contraction dim (d_in) of x / W1-rows stays un-padded.
    w1p = np.zeros((d_in, h2p), np.float64); w1p[:, :h2] = w1f
    s1p = np.zeros((1, h2p), np.float64);    s1p[0, :h2] = shift1
    w2p = np.zeros((h2p, lp), np.float64);   w2p[:h2, :latent] = w2f
    wmp = np.zeros((lp, lp), np.float64);    wmp[:latent, :latent] = wmf
    s2bm = np.zeros((2, lp), np.float64)
    s2bm[0, :latent] = shift2
    s2bm[1, :latent] = p["bm"]

    return {
        "w1": jnp.asarray(w1p, mxu_dtype),       # MXU operands in mxu_dtype
        "w2": jnp.asarray(w2p, mxu_dtype),
        "wm": jnp.asarray(wmp, mxu_dtype),
        "s1": jnp.asarray(s1p, jnp.float32),     # elementwise shifts stay fp32
        "s2bm": jnp.asarray(s2bm, jnp.float32),
        "d_in": d_in, "latent": latent, "h2p": h2p, "lp": lp,
    }


# ----------------------------------------------------------------------------
# Forward wrapper
# ----------------------------------------------------------------------------
def quantum_encoder_forward(x, prepared):
    """x: [batch, input_dim] float32.  Returns [batch, latent_dim] float32."""
    b, d_in = x.shape
    assert d_in == prepared["d_in"], "input_dim mismatch with prepared params"
    latent, h2p, lp = prepared["latent"], prepared["h2p"], prepared["lp"]
    mxu_dtype = prepared["w1"].dtype

    tile_budget, vmem_cap = _vmem_caps()
    tb = _pick_batch_tile(b, d_in, h2p, lp, tile_budget)
    bp = _round_up(b, tb)

    # No feature padding; skip the batch pad (and any copy in fp32) when possible.
    xk = x.astype(mxu_dtype)
    if bp != b:
        xk = jnp.pad(xk, ((0, bp - b), (0, 0)))

    est = _vmem_estimate_bytes(tb, d_in, h2p, lp)
    vmem_limit = int(min(max(int(1.5 * est), 16 << 20), vmem_cap))

    grid = (bp // tb,)
    out_padded = pl.pallas_call(
        quantum_encoder_kernel,
        out_shape=jax.ShapeDtypeStruct((bp, lp), jnp.float32),
        grid=grid,
        in_specs=[
            pl.BlockSpec((tb, d_in), lambda i: (i, 0)),    # x: tiled over batch, full feature extent
            pl.BlockSpec((d_in, h2p), lambda i: (0, 0)),   # W1 (resident)
            pl.BlockSpec((1, h2p), lambda i: (0, 0)),      # shift1 (resident)
            pl.BlockSpec((h2p, lp), lambda i: (0, 0)),     # W2 (resident)
            pl.BlockSpec((2, lp), lambda i: (0, 0)),       # [shift2; bm] (resident)
            pl.BlockSpec((lp, lp), lambda i: (0, 0)),      # fused Wm (resident)
        ],
        out_specs=pl.BlockSpec((tb, lp), lambda i: (i, 0)),
        compiler_params=pltpu.CompilerParams(
            dimension_semantics=("parallel",),
            vmem_limit_bytes=vmem_limit,
        ),
    )(xk, prepared["w1"], prepared["s1"], prepared["w2"], prepared["s2bm"], prepared["wm"])

    return out_padded[:b, :latent]


# ----------------------------------------------------------------------------
# Parameter init + pure-JAX reference (unfused math) for correctness checking
# ----------------------------------------------------------------------------
def init_params(key, input_dim, latent_dim):
    ks = jax.random.split(key, 8)
    h2 = latent_dim * 2
    return {
        # encoding_layers
        "w1": jax.random.normal(ks[0], (input_dim, h2), jnp.float32) * 0.05,
        "b1": jax.random.normal(ks[1], (h2,), jnp.float32) * 0.01,
        "bn1_gamma": jnp.ones((h2,), jnp.float32),
        "bn1_beta": jnp.zeros((h2,), jnp.float32),
        "bn1_mean": jnp.zeros((h2,), jnp.float32),
        "bn1_var": jnp.ones((h2,), jnp.float32),
        "w2": jax.random.normal(ks[2], (h2, latent_dim), jnp.float32) * 0.05,
        "b2": jax.random.normal(ks[3], (latent_dim,), jnp.float32) * 0.01,
        "bn2_gamma": jnp.ones((latent_dim,), jnp.float32),
        "bn2_beta": jnp.zeros((latent_dim,), jnp.float32),
        "bn2_mean": jnp.zeros((latent_dim,), jnp.float32),
        "bn2_var": jnp.ones((latent_dim,), jnp.float32),
        # quantum parameters
        "phase": jax.random.normal(ks[4], (latent_dim,), jnp.float32) * 0.1,
        "freq": jnp.ones((latent_dim,), jnp.float32),
        "ent": jax.random.normal(ks[5], (latent_dim, latent_dim), jnp.float32) * 0.01,
        # measurement_projection
        "wm": jax.random.normal(ks[6], (latent_dim, latent_dim), jnp.float32) * 0.05,
        "bm": jax.random.normal(ks[7], (latent_dim,), jnp.float32) * 0.01,
    }


def reference_forward(x, params):
    """Pure-JAX reference mirroring the torch module (eval mode), unfused."""
    def fold_bn(gamma, beta, mean, var, eps=1e-5):
        s = gamma / jnp.sqrt(var + eps)
        return s, beta - mean * s

    s1, t1 = fold_bn(params["bn1_gamma"], params["bn1_beta"],
                     params["bn1_mean"], params["bn1_var"])
    s2, t2 = fold_bn(params["bn2_gamma"], params["bn2_beta"],
                     params["bn2_mean"], params["bn2_var"])
    h = x @ params["w1"] + params["b1"]
    h = h * s1 + t1
    h = 0.5 * h * (1.0 + lax.erf(h * INV_SQRT2))
    enc = h @ params["w2"] + params["b2"]
    enc = enc * s2 + t2
    t = enc * params["freq"] + params["phase"]
    p = jnp.sin(t)
    sup = p + 0.5 * (p @ params["ent"])
    return jnp.tanh(sup @ params["wm"] + params["bm"])


if __name__ == "__main__":
    input_dim, latent_dim = 16, 32

    key = jax.random.PRNGKey(0)
    k_x1, k_x2, k_p = jax.random.split(key, 3)
    params = init_params(k_p, input_dim, latent_dim)

    # Parameter folding hoisted out of the forward path (done once).
    prepared_f32 = prepare_quantum_encoder_params(params)
    prepared_bf16 = prepare_quantum_encoder_params(params, mxu_dtype=jnp.bfloat16)

    # Case 1: small batch (<16) -> single-step grid.
    x1 = jax.random.normal(k_x1, (8, input_dim), jnp.float32)
    out1 = jax.block_until_ready(quantum_encoder_forward(x1, prepared_f32))
    ref1 = reference_forward(x1, params)
    assert out1.shape == (8, latent_dim)
    assert jnp.allclose(out1, ref1, atol=1e-5, rtol=1e-5), "fp32 mismatch (batch=8)"

    # Case 2: batch >= 16 -> >=2 grid steps (v7x dual-TC) + batch-remainder handling.
    x2 = jax.random.normal(k_x2, (48, input_dim), jnp.float32)
    out2 = jax.block_until_ready(quantum_encoder_forward(x2, prepared_f32))
    ref2 = reference_forward(x2, params)
    assert out2.shape == (48, latent_dim)
    assert jnp.allclose(out2, ref2, atol=1e-5, rtol=1e-5), "fp32 mismatch (batch=48)"

    # Case 3: bf16 MXU operands with fp32 accumulation (relaxed tolerance).
    out3 = jax.block_until_ready(quantum_encoder_forward(x2, prepared_bf16))
    assert out3.shape == (48, latent_dim)
    assert jnp.allclose(out3, ref2, atol=3e-2, rtol=3e-2), "bf16 mismatch (batch=48)"

    print("KERNEL_OK")
</pallas_src>

<mosaic_0001>
module attributes {stable_mosaic.version = 11 : i64} {
  func.func @quantum_encoder_kernel(%arg0: i32, %arg1: memref<8x16xf32, #tpu.memory_space<vmem>>, %arg2: memref<16x128xf32, #tpu.memory_space<vmem>>, %arg3: memref<1x128xf32, #tpu.memory_space<vmem>>, %arg4: memref<128x128xf32, #tpu.memory_space<vmem>>, %arg5: memref<2x128xf32, #tpu.memory_space<vmem>>, %arg6: memref<128x128xf32, #tpu.memory_space<vmem>>, %arg7: memref<8x128xf32, #tpu.memory_space<vmem>>) attributes {dimension_semantics = [#tpu.dimension_semantics<parallel>], iteration_bounds = array<i64: 1>, scalar_prefetch = 0 : i64, scratch_operands = 0 : i64, tpu.core_type = #tpu.core_type<tc>, window_params = [{transform_indices = @transform_0, window_bounds = array<i64: 8, 16>}, {pipeline_mode = #tpu.pipeline_mode<synchronous>, transform_indices = @transform_1, window_bounds = array<i64: 16, 128>}, {pipeline_mode = #tpu.pipeline_mode<synchronous>, transform_indices = @transform_2, window_bounds = array<i64: 1, 128>}, {pipeline_mode = #tpu.pipeline_mode<synchronous>, transform_indices = @transform_3, window_bounds = array<i64: 128, 128>}, {pipeline_mode = #tpu.pipeline_mode<synchronous>, transform_indices = @transform_4, window_bounds = array<i64: 2, 128>}, {pipeline_mode = #tpu.pipeline_mode<synchronous>, transform_indices = @transform_5, window_bounds = array<i64: 128, 128>}, {transform_indices = @transform_6, window_bounds = array<i64: 8, 128>}]} {
    %c0 = arith.constant 0 : index
    %c0_0 = arith.constant 0 : index
    %0 = vector.load %arg1[%c0, %c0_0] : memref<8x16xf32, #tpu.memory_space<vmem>>, vector<8x16xf32>
    %c0_1 = arith.constant 0 : index
    %c0_2 = arith.constant 0 : index
    %1 = vector.load %arg2[%c0_1, %c0_2] : memref<16x128xf32, #tpu.memory_space<vmem>>, vector<16x128xf32>
    %cst = arith.constant dense<0.000000e+00> : vector<8x128xf32>
    %2 = tpu.matmul %0, %1, %cst {dimension_numbers = #tpu.dot_dimension_numbers<[1], [0], [0], [1], [0, 0, 1, 1], [], []>} : vector<8x16xf32>, vector<16x128xf32>, vector<8x128xf32> -> vector<8x128xf32>
    %c0_3 = arith.constant 0 : index
    %c0_4 = arith.constant 0 : index
    %3 = vector.load %arg3[%c0_3, %c0_4] : memref<1x128xf32, #tpu.memory_space<vmem>>, vector<1x128xf32>
    %4 = vector.broadcast %3 : vector<1x128xf32> to vector<8x128xf32>
    %5 = arith.addf %2, %4 : vector<8x128xf32>
    %cst_5 = arith.constant 5.000000e-01 : f32
    %6 = vector.broadcast %cst_5 : f32 to vector<8x128xf32>
    %7 = arith.mulf %6, %5 : vector<8x128xf32>
    %cst_6 = arith.constant 0.707106769 : f32
    %8 = vector.broadcast %cst_6 : f32 to vector<8x128xf32>
    %9 = arith.mulf %5, %8 : vector<8x128xf32>
    %10 = math.erf %9 : vector<8x128xf32>
    %cst_7 = arith.constant 1.000000e+00 : f32
    %11 = vector.broadcast %cst_7 : f32 to vector<8x128xf32>
    %12 = arith.addf %11, %10 : vector<8x128xf32>
    %13 = arith.mulf %7, %12 : vector<8x128xf32>
    %c0_8 = arith.constant 0 : index
    %c0_9 = arith.constant 0 : index
    %14 = vector.load %arg4[%c0_8, %c0_9] : memref<128x128xf32, #tpu.memory_space<vmem>>, vector<128x128xf32>
    %cst_10 = arith.constant dense<0.000000e+00> : vector<8x128xf32>
    %15 = tpu.matmul %13, %14, %cst_10 {dimension_numbers = #tpu.dot_dimension_numbers<[1], [0], [0], [1], [0, 0, 1, 1], [], []>} : vector<8x128xf32>, vector<128x128xf32>, vector<8x128xf32> -> vector<8x128xf32>
    %c0_11 = arith.constant 0 : index
    %c0_12 = arith.constant 0 : index
    %16 = vector.load %arg5[%c0_11, %c0_12] : memref<2x128xf32, #tpu.memory_space<vmem>>, vector<1x128xf32>
    %17 = vector.broadcast %16 : vector<1x128xf32> to vector<8x128xf32>
    %18 = arith.addf %15, %17 : vector<8x128xf32>
    %19 = math.sin %18 : vector<8x128xf32>
    %c0_13 = arith.constant 0 : index
    %c0_14 = arith.constant 0 : index
    %20 = vector.load %arg6[%c0_13, %c0_14] : memref<128x128xf32, #tpu.memory_space<vmem>>, vector<128x128xf32>
    %cst_15 = arith.constant dense<0.000000e+00> : vector<8x128xf32>
    %21 = tpu.matmul %19, %20, %cst_15 {dimension_numbers = #tpu.dot_dimension_numbers<[1], [0], [0], [1], [0, 0, 1, 1], [], []>} : vector<8x128xf32>, vector<128x128xf32>, vector<8x128xf32> -> vector<8x128xf32>
    %c1 = arith.constant 1 : index
    %c0_16 = arith.constant 0 : index
    %22 = vector.load %arg5[%c1, %c0_16] : memref<2x128xf32, #tpu.memory_space<vmem>>, vector<1x128xf32>
    %23 = vector.broadcast %22 : vector<1x128xf32> to vector<8x128xf32>
    %24 = arith.addf %21, %23 : vector<8x128xf32>
    %25 = math.tanh %24 : vector<8x128xf32>
    %c0_17 = arith.constant 0 : index
    %c0_18 = arith.constant 0 : index
    %26 = vector.load %arg7[%c0_17, %c0_18] : memref<8x128xf32, #tpu.memory_space<vmem>>, vector<8x128xf32>
    tpu.vector_store %arg7[%c0_17, %c0_18], %25 {strides = array<i32>} : memref<8x128xf32, #tpu.memory_space<vmem>>, vector<8x128xf32>,
    return
  }
  func.func @transform_0(%arg0: i32) -> (i32, i32) {
    %c0_i32 = arith.constant 0 : i32
    %c0_i32_0 = arith.constant 0 : i32
    return %arg0, %c0_i32 : i32, i32
  }
  func.func @transform_1(%arg0: i32) -> (i32, i32) {
    %c0_i32 = arith.constant 0 : i32
    %c0_i32_0 = arith.constant 0 : i32
    %c0_i32_1 = arith.constant 0 : i32
    return %c0_i32, %c0_i32_0 : i32, i32
  }
  func.func @transform_2(%arg0: i32) -> (i32, i32) {
    %c0_i32 = arith.constant 0 : i32
    %c0_i32_0 = arith.constant 0 : i32
    %c0_i32_1 = arith.constant 0 : i32
    return %c0_i32, %c0_i32_0 : i32, i32
  }
  func.func @transform_3(%arg0: i32) -> (i32, i32) {
    %c0_i32 = arith.constant 0 : i32
    %c0_i32_0 = arith.constant 0 : i32
    %c0_i32_1 = arith.constant 0 : i32
    return %c0_i32, %c0_i32_0 : i32, i32
  }
  func.func @transform_4(%arg0: i32) -> (i32, i32) {
    %c0_i32 = arith.constant 0 : i32
    %c0_i32_0 = arith.constant 0 : i32
    %c0_i32_1 = arith.constant 0 : i32
    return %c0_i32, %c0_i32_0 : i32, i32
  }
  func.func @transform_5(%arg0: i32) -> (i32, i32) {
    %c0_i32 = arith.constant 0 : i32
    %c0_i32_0 = arith.constant 0 : i32
    %c0_i32_1 = arith.constant 0 : i32
    return %c0_i32, %c0_i32_0 : i32, i32
  }
  func.func @transform_6(%arg0: i32) -> (i32, i32) {
    %c0_i32 = arith.constant 0 : i32
    %c0_i32_0 = arith.constant 0 : i32
    return %arg0, %c0_i32 : i32, i32
  }
}

</mosaic_0001>

<llo_original>
// kernel: tpu_custom_call.1
$region0: #{tpu_custom_call.1}
  #allocation0 [shape = 'u32[]', space=smem, size = 0x4, offset = 0x4, fixed_abs, tag = 'smem constant byte address 0x4 - core index']
  #allocation1 [shape = 'u32[144,128]{1,0:T(1,128)}', space=vmem, size = 0x12000, scoped, tag = 'internal scratch']
  %s0 = inlined_call_operand.hbm [shape: f32[8,16], index: 0, kind: input, shape index: {}]
  %s1 = inlined_call_operand.hbm [shape: f32[16,128], index: 1, kind: input, shape index: {}]
  %s2 = inlined_call_operand.vmem [shape: f32[1,128], index: 2, kind: input, shape index: {}]
  %s3 = inlined_call_operand.hbm [shape: f32[128,128], index: 3, kind: input, shape index: {}]
  %s4 = inlined_call_operand.vmem [shape: f32[2,128], index: 4, kind: input, shape index: {}]
  %s5 = inlined_call_operand.hbm [shape: f32[128,128], index: 5, kind: input, shape index: {}]
  %s6 = inlined_call_operand.hbm [shape: f32[8,128], index: 6, kind: output, shape index: {}]
  %s7 = sld [smem:[#allocation0]]
  $region50: #{tpu_custom_call.1} parent=0
    _
  %s9 = ssub.s32 1, %s7
  %s10 = scalar_select 0, %s9, %s7
  $region1: #{tpu_custom_call.1} parent=0
    #allocation2 [shape = 'u8[4096]{0}', space=vmem, size = 0x1000, scoped, tag = 'input window, operand 0, single buffered']
    #allocation3 [shape = 's32[1]{0}', space=sflag, size = 0x4, scoped, tag = 'scoped memory for tpu_custom_call.1']
    #allocation4 [shape = 's32[1]{0}', space=sflag, size = 0x4, scoped, tag = 'scoped memory for tpu_custom_call.1']
    #allocation5 [shape = 'u8[8192]{0}', space=vmem, size = 0x2000, scoped, tag = 'input window, operand 1, single buffered']
    #allocation6 [shape = 's32[1]{0}', space=sflag, size = 0x4, scoped, tag = 'scoped memory for tpu_custom_call.1']
    #allocation7 [shape = 'u8[65536]{0}', space=vmem, size = 0x10000, scoped, tag = 'input window, operand 3, single buffered']
    #allocation8 [shape = 'u8[65536]{0}', space=vmem, size = 0x10000, scoped, tag = 'input window, operand 5, single buffered']
    #allocation9 [shape = 's32[1]{0}', space=sflag, size = 0x4, scoped, tag = 'scoped memory for tpu_custom_call.1']
    #allocation10 [shape = 'u8[4096]{0}', space=vmem, size = 0x1000, scoped, tag = 'output window, operand 0, single buffered']
    %11 = vsyncpa [#allocation3], 0
    %12 = vsyncpa [#allocation6], 0
    %13 = vsyncpa [#allocation9], 0
    %14 = vsyncpa [#allocation4], 0
    // Predicated region
    $region2: #{tpu_custom_call.1} parent=1 // pred_check
      _
    $region3: #{tpu_custom_call.1} parent=1 // pred_check_branch
      %16 = sbr.rel (0) target = $region5
    $region4: #{tpu_custom_call.1} parent=1 // pred_region
      %s18 = ssub.s32 128, 128
      %19 = vsyncadd [#allocation3], %s18
      %s21 = sshll.u32 [#allocation2], 4
      %s22 = int_to_ptr.vmem [resolvable:$true] %s21
      %24 = dma.hbm_to_vmem [thread:$0]  %s0, 128, %s22, [#allocation3]
    $region5: #{tpu_custom_call.1} parent=1 // pred_fallthru
      _
    // Predicated region
    $region6: #{tpu_custom_call.1} parent=1 // pred_check
      _
    $region7: #{tpu_custom_call.1} parent=1 // pred_check_branch
      %26 = sbr.rel (0) target = $region9
    $region8: #{tpu_custom_call.1} parent=1 // pred_region
      %s28 = ssub.s32 256, 256
      %29 = vsyncadd [#allocation6], %s28
      %s30 = sshll.u32 [#allocation5], 4
      %s31 = int_to_ptr.vmem [resolvable:$true] %s30
      %36 = dma.hbm_to_vmem [thread:$0]  %s1, 256, %s31, [#allocation6], 128, 128, 8
    $region9: #{tpu_custom_call.1} parent=1 // pred_fallthru
      _
    // Predicated region
    $region10: #{tpu_custom_call.1} parent=1 // pred_check
      _
    $region11: #{tpu_custom_call.1} parent=1 // pred_check_branch
      %38 = sbr.rel (0) target = $region13
    $region12: #{tpu_custom_call.1} parent=1 // pred_region
      _
    $region13: #{tpu_custom_call.1} parent=1 // pred_fallthru
      _
    // Predicated region
    $region14: #{tpu_custom_call.1} parent=1 // pred_check
      _
    $region15: #{tpu_custom_call.1} parent=1 // pred_check_branch
      %40 = sbr.rel (0) target = $region17
    $region16: #{tpu_custom_call.1} parent=1 // pred_region
      %s42 = ssub.s32 2048, 2048
      %43 = vsyncadd [#allocation6], %s42
      %s44 = sshll.u32 [#allocation7], 4
      %s45 = int_to_ptr.vmem [resolvable:$true] %s44
      %50 = dma.hbm_to_vmem [thread:$0]  %s3, 2048, %s45, [#allocation6], 128, 128, 8
    $region17: #{tpu_custom_call.1} parent=1 // pred_fallthru
      _
    // Predicated region
    $region18: #{tpu_custom_call.1} parent=1 // pred_check
      _
    $region19: #{tpu_custom_call.1} parent=1 // pred_check_branch
      %52 = sbr.rel (0) target = $region21
    $region20: #{tpu_custom_call.1} parent=1 // pred_region
      _
    $region21: #{tpu_custom_call.1} parent=1 // pred_fallthru
      _
    // Predicated region
    $region22: #{tpu_custom_call.1} parent=1 // pred_check
      _
    $region23: #{tpu_custom_call.1} parent=1 // pred_check_branch
      %54 = sbr.rel (0) target = $region25
    $region24: #{tpu_custom_call.1} parent=1 // pred_region
      %s56 = ssub.s32 2048, 2048
      %57 = vsyncadd [#allocation9], %s56
      %s58 = sshll.u32 [#allocation8], 4
      %s59 = int_to_ptr.vmem [resolvable:$true] %s58
      %64 = dma.hbm_to_vmem [thread:$0]  %s5, 2048, %s59, [#allocation9], 128, 128, 8
    $region25: #{tpu_custom_call.1} parent=1 // pred_fallthru
      _
    // Predicated region
    $region26: #{tpu_custom_call.1} parent=1 // pred_check
      _
    $region27: #{tpu_custom_call.1} parent=1 // pred_check_branch
      %66 = sbr.rel (0) target = $region29
    $region28: #{tpu_custom_call.1} parent=1 // pred_region
      %67 = dma.done [#allocation3], 128
    $region29: #{tpu_custom_call.1} parent=1 // pred_fallthru
      _
    // Predicated region
    $region30: #{tpu_custom_call.1} parent=1 // pred_check
      _
    $region31: #{tpu_custom_call.1} parent=1 // pred_check_branch
      %69 = sbr.rel (0) target = $region33
    $region32: #{tpu_custom_call.1} parent=1 // pred_region
      %70 = dma.done [#allocation6], 256
    $region33: #{tpu_custom_call.1} parent=1 // pred_fallthru
      _
    // Predicated region
    $region34: #{tpu_custom_call.1} parent=1 // pred_check
      _
    $region35: #{tpu_custom_call.1} parent=1 // pred_check_branch
      %72 = sbr.rel (0) target = $region37
    $region36: #{tpu_custom_call.1} parent=1 // pred_region
      %73 = dma.done [#allocation6], 2048
    $region37: #{tpu_custom_call.1} parent=1 // pred_fallthru
      _
    // Predicated region
    $region38: #{tpu_custom_call.1} parent=1 // pred_check
      _
    $region39: #{tpu_custom_call.1} parent=1 // pred_check_branch
      %75 = sbr.rel (0) target = $region41
    $region40: #{tpu_custom_call.1} parent=1 // pred_region
      %76 = dma.done [#allocation9], 2048
    $region41: #{tpu_custom_call.1} parent=1 // pred_fallthru
      _
    %v77 = vld [vmem:[#allocation2] sm:$0xff]
    %v78 = vld [vmem:[#allocation5] sm:$0xff]
    %v79 = vld [vmem:[#allocation5 + $0x8] sm:$0xff]
    %v80 = vld [vmem:[%s2] sm:$0x1]
    %v82 = vlaneseq
    %v83 = vshrl.u32 %v82, 7
    %v84 = vsub.s32 0, %v83
    %v85 = vrot.slane %v80, %v84
    %vm87 = vcmask 130048
    %v89 = vsel %vm87, %v77, 0
    %91 = vmatprep.subr.mxu0 0.0
    %92 = vmatpush1.msra.mxu0 %v78
    %93 = vmatprep.subr.mxu0 0.0
    %94 = vmatpush1.msra.mxu0 %v79
    %95 = vmatprep.subr.mxu0 0.0
    %96 = vmatpush1.msra.mxu0 0.0
    %97 = vmatprep.subr.mxu0 0.0
    %98 = vmatpush1.msra.mxu0 0.0
    %99 = vmatprep.subr.mxu0 0.0
    %100 = vmatpush1.msra.mxu0 0.0
    %101 = vmatprep.subr.mxu0 0.0
    %102 = vmatpush1.msra.mxu0 0.0
    %103 = vmatprep.subr.mxu0 0.0
    %104 = vmatpush1.msra.mxu0 0.0
    %105 = vmatprep.subr.mxu0 0.0
    %106 = vmatpush1.msra.mxu0 0.0
    %107 = vmatprep.subr.mxu0 0.0
    %108 = vmatpush1.msra.mxu0 0.0
    %109 = vmatprep.subr.mxu0 0.0
    %110 = vmatpush1.msra.mxu0 0.0
    %111 = vmatprep.subr.mxu0 0.0
    %112 = vmatpush1.msra.mxu0 0.0
    %113 = vmatprep.subr.mxu0 0.0
    %114 = vmatpush1.msra.mxu0 0.0
    %115 = vmatprep.subr.mxu0 0.0
    %116 = vmatpush1.msra.mxu0 0.0
    %117 = vmatprep.subr.mxu0 0.0
    %118 = vmatpush1.msra.mxu0 0.0
    %119 = vmatprep.subr.mxu0 0.0
    %120 = vmatpush1.msra.mxu0 0.0
    %121 = vmatprep.subr.mxu0 0.0
    %122 = vmatpush1.msra.mxu0 0.0
    %123 = vmatprep.subr.mxu0 0.0
    %124 = vmatpush1.msra.mxu0 0.0
    %125 = vmatprep.subr.mxu0 0.0
    %126 = vmatpush1.msra.mxu0 0.0
    %127 = vmatprep.subr.mxu0 0.0
    %128 = vmatpush1.msra.mxu0 0.0
    %129 = vmatprep.subr.mxu0 0.0
    %130 = vmatpush1.msra.mxu0 0.0
    %131 = vmatprep.subr.mxu0 0.0
    %132 = vmatpush1.msra.mxu0 0.0
    %133 = vmatprep.subr.mxu0 0.0
    %134 = vmatpush1.msra.mxu0 0.0
    %135 = vmatprep.subr.mxu0 0.0
    %136 = vmatpush1.msra.mxu0 0.0
    %137 = vmatprep.subr.mxu0 0.0
    %138 = vmatpush1.msra.mxu0 0.0
    %139 = vmatprep.subr.mxu0 0.0
    %140 = vmatpush1.msra.mxu0 0.0
    %141 = vmatprep.subr.mxu0 0.0
    %142 = vmatpush1.msra.mxu0 0.0
    %143 = vmatprep.subr.mxu0 0.0
    %144 = vmatpush1.msra.mxu0 0.0
    %145 = vmatprep.subr.mxu0 0.0
    %146 = vmatpush1.msra.mxu0 0.0
    %147 = vmatprep.subr.mxu0 0.0
    %148 = vmatpush1.msra.mxu0 0.0
    %149 = vmatprep.subr.mxu0 0.0
    %150 = vmatpush1.msra.mxu0 0.0
    %151 = vmatprep.subr.mxu0 0.0
    %152 = vmatpush1.msra.mxu0 0.0
    %153 = vmatprep.subr.mxu0 0.0
    %154 = vmatpush1.msra.mxu0 0.0
    %155 = vmatprep.mubr.f32.mxu0 0.0
    %156 = vmatmul.mubr.f32.gmra.mrb[0].mxu0 %v89
    %v157 = vpop.f32.mrb[0].mxu0
    %v158 = vadd.f32 %v85, %v157
    %v159 = vpop.f32.mrb[0].mxu0
    %160 = vdwg.mxu0
    %v161 = vmul.f32 %v158, 0.5
    %v162 = vmul.f32 %v158, 0.70710677
    %v163 = verf.f32.pop %v162
    %v164 = vadd.f32 %v163, 1.0
    %v165 = vmul.f32 %v161, %v164
    %v166 = vld [vmem:[#allocation7] sm:$0xff]
    %v167 = vld [vmem:[#allocation7 + $0x8] sm:$0xff]
    %v168 = vld [vmem:[#allocation7 + $0x10] sm:$0xff]
    %v169 = vld [vmem:[#allocation7 + $0x18] sm:$0xff]
    %v170 = vld [vmem:[#allocation7 + $0x20] sm:$0xff]
    %v171 = vld [vmem:[#allocation7 + $0x28] sm:$0xff]
    %v172 = vld [vmem:[#allocation7 + $0x30] sm:$0xff]
    %v173 = vld [vmem:[#allocation7 + $0x38] sm:$0xff]
    %v174 = vld [vmem:[#allocation7 + $0x40] sm:$0xff]
    %v175 = vld [vmem:[#allocation7 + $0x48] sm:$0xff]
    %v176 = vld [vmem:[#allocation7 + $0x50] sm:$0xff]
    %v177 = vld [vmem:[#allocation7 + $0x58] sm:$0xff]
    %v178 = vld [vmem:[#allocation7 + $0x60] sm:$0xff]
    %v179 = vld [vmem:[#allocation7 + $0x68] sm:$0xff]
    %v180 = vld [vmem:[#allocation7 + $0x70] sm:$0xff]
    %v181 = vld [vmem:[#allocation7 + $0x78] sm:$0xff]
    %v182 = vld [vmem:[%s4] sm:$0x1]
    %v183 = vlaneseq
    %v184 = vshrl.u32 %v183, 7
    %v185 = vsub.s32 0, %v184
    %v186 = vrot.slane %v182, %v185
    %187 = vmatprep.subr.mxu0 0.0
    %188 = vmatpush1.msra.mxu0 %v166
    %189 = vmatprep.subr.mxu0 0.0
    %190 = vmatpush1.msra.mxu0 %v167
    %191 = vmatprep.subr.mxu0 0.0
    %192 = vmatpush1.msra.mxu0 %v168
    %193 = vmatprep.subr.mxu0 0.0
    %194 = vmatpush1.msra.mxu0 %v169
    %195 = vmatprep.subr.mxu0 0.0
    %196 = vmatpush1.msra.mxu0 %v170
    %197 = vmatprep.subr.mxu0 0.0
    %198 = vmatpush1.msra.mxu0 %v171
    %199 = vmatprep.subr.mxu0 0.0
    %200 = vmatpush1.msra.mxu0 %v172
    %201 = vmatprep.subr.mxu0 0.0
    %202 = vmatpush1.msra.mxu0 %v173
    %203 = vmatprep.subr.mxu0 0.0
    %204 = vmatpush1.msra.mxu0 %v174
    %205 = vmatprep.subr.mxu0 0.0
    %206 = vmatpush1.msra.mxu0 %v175
    %207 = vmatprep.subr.mxu0 0.0
    %208 = vmatpush1.msra.mxu0 %v176
    %209 = vmatprep.subr.mxu0 0.0
    %210 = vmatpush1.msra.mxu0 %v177
    %211 = vmatprep.subr.mxu0 0.0
    %212 = vmatpush1.msra.mxu0 %v178
    %213 = vmatprep.subr.mxu0 0.0
    %214 = vmatpush1.msra.mxu0 %v179
    %215 = vmatprep.subr.mxu0 0.0
    %216 = vmatpush1.msra.mxu0 %v180
    %217 = vmatprep.subr.mxu0 0.0
    %218 = vmatpush1.msra.mxu0 %v181
    %219 = vmatprep.subr.mxu0 0.0
    %220 = vmatpush1.msra.mxu0 0.0
    %221 = vmatprep.subr.mxu0 0.0
    %222 = vmatpush1.msra.mxu0 0.0
    %223 = vmatprep.subr.mxu0 0.0
    %224 = vmatpush1.msra.mxu0 0.0
    %225 = vmatprep.subr.mxu0 0.0
    %226 = vmatpush1.msra.mxu0 0.0
    %227 = vmatprep.subr.mxu0 0.0
    %228 = vmatpush1.msra.mxu0 0.0
    %229 = vmatprep.subr.mxu0 0.0
    %230 = vmatpush1.msra.mxu0 0.0
    %231 = vmatprep.subr.mxu0 0.0
    %232 = vmatpush1.msra.mxu0 0.0
    %233 = vmatprep.subr.mxu0 0.0
    %234 = vmatpush1.msra.mxu0 0.0
    %235 = vmatprep.subr.mxu0 0.0
    %236 = vmatpush1.msra.mxu0 0.0
    %237 = vmatprep.subr.mxu0 0.0
    %238 = vmatpush1.msra.mxu0 0.0
    %239 = vmatprep.subr.mxu0 0.0
    %240 = vmatpush1.msra.mxu0 0.0
    %241 = vmatprep.subr.mxu0 0.0
    %242 = vmatpush1.msra.mxu0 0.0
    %243 = vmatprep.subr.mxu0 0.0
    %244 = vmatpush1.msra.mxu0 0.0
    %245 = vmatprep.subr.mxu0 0.0
    %246 = vmatpush1.msra.mxu0 0.0
    %247 = vmatprep.subr.mxu0 0.0
    %248 = vmatpush1.msra.mxu0 0.0
    %249 = vmatprep.subr.mxu0 0.0
    %250 = vmatpush1.msra.mxu0 0.0
    %251 = vmatprep.mubr.f32.mxu0 0.0
    %252 = vmatmul.mubr.f32.gmra.mrb[0].mxu0 %v165
    %v253 = vpop.f32.mrb[0].mxu0
    %v254 = vadd.f32 %v186, %v253
    %v255 = vpop.f32.mrb[0].mxu0
    %256 = vdwg.mxu0
    %v257 = vand.u32 2147483647, %v254
    %vm258 = vcmp.le.f32.partialorder %v257, 0.7853982
    %vm259 = vcmp.lt.s32.totalorder %v254, 0
    %v260 = vand.u32 %v254, 2139095040
    %v261 = vshrl.u32 %v260, 23
    %v262 = vsub.s32 %v261, 127
    %v263 = vand.u32 2147483647, %v254
    %v264 = vand.u32 %v263, 8388607
    %v265 = vor.u32 %v264, 8388608
    %v266 = vsub.s32 0, %v265
    %v267 = vadd.s32 %v262, 1
    %vm268 = vcmp.gt.s32.totalorder %v267, 0
    %v269 = vsel %vm268, %v267, 0
    %v270 = vshrl.u32 %v269, 5
    %v271 = vand.u32 %v269, 31
    %v272 = vsub.s32 32, %v271
    %v273 = vshrl.u32 683565275, %v272
    %v274 = vshll.u32 683565275, %v271
    %v275 = vshrl.u32 2475754826, %v272
    %v276 = vor.u32 %v274, %v275
    %v277 = vshll.u32 2475754826, %v271
    %v278 = vshrl.u32 2131351028, %v272
    %v279 = vor.u32 %v277, %v278
    %v280 = vshll.u32 2131351028, %v271
    %v281 = vshrl.u32 2102212464, %v272
    %v282 = vor.u32 %v280, %v281
    %v283 = vshll.u32 2102212464, %v271
    %v284 = vshrl.u32 920167782, %v272
    %v285 = vor.u32 %v283, %v284
    %v286 = vshll.u32 920167782, %v271
    %v287 = vshrl.u32 1326507024, %v272
    %v288 = vor.u32 %v286, %v287
    %vm289 = vcmp.lt.s32.totalorder %v270, 1
    %vm290 = vcmp.lt.s32.totalorder %v270, 2
    %vm291 = vcmp.lt.s32.totalorder %v270, 3
    %vm292 = vcmp.lt.s32.totalorder %v270, 4
    %v293 = vsel %vm289, %v273, %v276
    %v294 = vsel %vm292, %v282, 2102212464
    %v295 = vsel %vm291, %v279, %v294
    %v296 = vsel %vm290, %v293, %v295
    %v297 = vsel %vm289, %v276, %v279
    %v298 = vsel %vm292, %v285, 920167782
    %v299 = vsel %vm291, %v282, %v298
    %v300 = vsel %vm290, %v297, %v299
    %v301 = vsel %vm289, %v279, %v282
    %v302 = vsel %vm292, %v288, 1326507024
    %v303 = vsel %vm291, %v285, %v302
    %v304 = vsel %vm290, %v301, %v303
    %v305 = vshll.u32 %v265, 8
    %v306 = vmul.u32.u64.compose %v305, %v304
    %v307 = vextract.low.u32 %v306
    %v308 = vextract.high.u32 %v306
    %v309 = vmul.u32.u64.compose %v305, %v300
    %v310 = vextract.low.u32 %v309
    %v311 = vextract.high.u32 %v309
    %v312 = vmul.u32 %v305, %v296
    %v313 = vadd.s32 %v308, %v310
    %vm314 = vc.u32 %v308, %v310
    %v315 = vadd.s32 %v311, 1
    %v316 = vsel %vm314, %v315, %v311
    %v317 = vadd.s32 %v312, %v316
    %v318 = vadd.s32 %v317, 536870912
    %v319 = vshrl.u32 %v318, 30
    %v320 = vshll.u32 %v319, 30
    %v321 = vsub.s32 %v317, %v320
    %vm322 = vcmp.lt.s32.totalorder %v321, 0
    %v323 = vsub.s32 0, %v321
    %v324 = vsel %vm322, %v323, %v321
    %v325 = vclz %v324
    %v326 = vsub.s32 %v325, 2
    %vm327 = vcmp.gt.s32.totalorder 0, %v326
    %v328 = vsel %vm327, 0, %v326
    %v329 = vsub.s32 32, %v328
    %v330 = vshll.u32 %v321, %v328
    %v331 = vshrl.u32 %v313, %v329
    %v332 = vor.u32 %v330, %v331
    %v333 = vsub.s32 4294967266, %v328
    %v334 = vadd.s32 %v333, 127
    %v335 = vshll.u32 %v334, 23
    %v336 = vor.u32 4788187, %v335
    %v337 = vand.u32 2147483647, %v336
    %v339 = vcvt.s32.f32 %v332
    %v340 = vmul.f32 %v339, %v337
    %v341 = vxor.u32 %v340, 2147483648
    %v342 = vsel %vm259, %v341, %v340
    %v343 = vsub.s32 4, %v319
    %v344 = vsel %vm259, %v343, %v319
    %v345 = vsel %vm258, %v254, %v342
    %v346 = vsel %vm258, 0, %v344
    %v347 = vcosq.f32.pop %v345
    %v348 = vsinq.f32.pop %v345
    %vm349 = vweird.f32 %v254
    %v350 = vadd.s32 %v346, 3
    %v351 = vand.u32 %v350, 3
    %vm352 = vcmp.lt.s32.totalorder %v351, 2
    %vm353 = vcmp.eq.s32.totalorder %v351, 0
    %v354 = vxor.u32 %v348, 2147483648
    %v355 = vsel %vm353, %v347, %v354
    %vm356 = vcmp.eq.s32.totalorder %v351, 2
    %v357 = vxor.u32 %v347, 2147483648
    %v358 = vsel %vm356, %v357, %v348
    %v359 = vsel %vm352, %v355, %v358
    %v360 = vsel %vm349, nan, %v359
    %v361 = vld [vmem:[#allocation8] sm:$0xff]
    %v362 = vld [vmem:[#allocation8 + $0x8] sm:$0xff]
    %v363 = vld [vmem:[#allocation8 + $0x10] sm:$0xff]
    %v364 = vld [vmem:[#allocation8 + $0x18] sm:$0xff]
    %v365 = vld [vmem:[#allocation8 + $0x20] sm:$0xff]
    %v366 = vld [vmem:[#allocation8 + $0x28] sm:$0xff]
    %v367 = vld [vmem:[#allocation8 + $0x30] sm:$0xff]
    %v368 = vld [vmem:[#allocation8 + $0x38] sm:$0xff]
    %v369 = vld [vmem:[#allocation8 + $0x40] sm:$0xff]
    %v370 = vld [vmem:[#allocation8 + $0x48] sm:$0xff]
    %v371 = vld [vmem:[#allocation8 + $0x50] sm:$0xff]
    %v372 = vld [vmem:[#allocation8 + $0x58] sm:$0xff]
    %v373 = vld [vmem:[#allocation8 + $0x60] sm:$0xff]
    %v374 = vld [vmem:[#allocation8 + $0x68] sm:$0xff]
    %v375 = vld [vmem:[#allocation8 + $0x70] sm:$0xff]
    %v376 = vld [vmem:[#allocation8 + $0x78] sm:$0xff]
    %v377 = vld [vmem:[%s4 + $0x1] sm:$0x1]
    %v378 = vlaneseq
    %v379 = vshrl.u32 %v378, 7
    %v380 = vsub.s32 0, %v379
    %v381 = vrot.slane %v377, %v380
    %382 = vmatprep.subr.mxu0 0.0
    %383 = vmatpush1.msra.mxu0 %v361
    %384 = vmatprep.subr.mxu0 0.0
    %385 = vmatpush1.msra.mxu0 %v362
    %386 = vmatprep.subr.mxu0 0.0
    %387 = vmatpush1.msra.mxu0 %v363
    %388 = vmatprep.subr.mxu0 0.0
    %389 = vmatpush1.msra.mxu0 %v364
    %390 = vmatprep.subr.mxu0 0.0
    %391 = vmatpush1.msra.mxu0 %v365
    %392 = vmatprep.subr.mxu0 0.0
    %393 = vmatpush1.msra.mxu0 %v366
    %394 = vmatprep.subr.mxu0 0.0
    %395 = vmatpush1.msra.mxu0 %v367
    %396 = vmatprep.subr.mxu0 0.0
    %397 = vmatpush1.msra.mxu0 %v368
    %398 = vmatprep.subr.mxu0 0.0
    %399 = vmatpush1.msra.mxu0 %v369
    %400 = vmatprep.subr.mxu0 0.0
    %401 = vmatpush1.msra.mxu0 %v370
    %402 = vmatprep.subr.mxu0 0.0
    %403 = vmatpush1.msra.mxu0 %v371
    %404 = vmatprep.subr.mxu0 0.0
    %405 = vmatpush1.msra.mxu0 %v372
    %406 = vmatprep.subr.mxu0 0.0
    %407 = vmatpush1.msra.mxu0 %v373
    %408 = vmatprep.subr.mxu0 0.0
    %409 = vmatpush1.msra.mxu0 %v374
    %410 = vmatprep.subr.mxu0 0.0
    %411 = vmatpush1.msra.mxu0 %v375
    %412 = vmatprep.subr.mxu0 0.0
    %413 = vmatpush1.msra.mxu0 %v376
    %414 = vmatprep.subr.mxu0 0.0
    %415 = vmatpush1.msra.mxu0 0.0
    %416 = vmatprep.subr.mxu0 0.0
    %417 = vmatpush1.msra.mxu0 0.0
    %418 = vmatprep.subr.mxu0 0.0
    %419 = vmatpush1.msra.mxu0 0.0
    %420 = vmatprep.subr.mxu0 0.0
    %421 = vmatpush1.msra.mxu0 0.0
    %422 = vmatprep.subr.mxu0 0.0
    %423 = vmatpush1.msra.mxu0 0.0
    %424 = vmatprep.subr.mxu0 0.0
    %425 = vmatpush1.msra.mxu0 0.0
    %426 = vmatprep.subr.mxu0 0.0
    %427 = vmatpush1.msra.mxu0 0.0
    %428 = vmatprep.subr.mxu0 0.0
    %429 = vmatpush1.msra.mxu0 0.0
    %430 = vmatprep.subr.mxu0 0.0
    %431 = vmatpush1.msra.mxu0 0.0
    %432 = vmatprep.subr.mxu0 0.0
    %433 = vmatpush1.msra.mxu0 0.0
    %434 = vmatprep.subr.mxu0 0.0
    %435 = vmatpush1.msra.mxu0 0.0
    %436 = vmatprep.subr.mxu0 0.0
    %437 = vmatpush1.msra.mxu0 0.0
    %438 = vmatprep.subr.mxu0 0.0
    %439 = vmatpush1.msra.mxu0 0.0
    %440 = vmatprep.subr.mxu0 0.0
    %441 = vmatpush1.msra.mxu0 0.0
    %442 = vmatprep.subr.mxu0 0.0
    %443 = vmatpush1.msra.mxu0 0.0
    %444 = vmatprep.subr.mxu0 0.0
    %445 = vmatpush1.msra.mxu0 0.0
    %446 = vmatprep.mubr.f32.mxu0 0.0
    %447 = vmatmul.mubr.f32.gmra.mrb[0].mxu0 %v360
    %v448 = vpop.f32.mrb[0].mxu0
    %v449 = vadd.f32 %v381, %v448
    %v450 = vpop.f32.mrb[0].mxu0
    %451 = vdwg.mxu0
    %v452 = vtanh.pop %v449
    %453 = vst [vmem:[#allocation10] sm:$0xff] %v452
    // Predicated region
    $region42: #{tpu_custom_call.1} parent=1 // pred_check
      _
    $region43: #{tpu_custom_call.1} parent=1 // pred_check_branch
      %455 = sbr.rel (0) target = $region45
    $region44: #{tpu_custom_call.1} parent=1 // pred_region
      %s457 = ssub.s32 128, 128
      %458 = vsyncadd [#allocation4], %s457
      %s460 = sshll.u32 [#allocation10], 4
      %s461 = int_to_ptr.vmem [resolvable:$true] %s460
      %463 = dma.vmem_to_hbm [thread:$0]  %s461, 128, %s6, [#allocation4]
    $region45: #{tpu_custom_call.1} parent=1 // pred_fallthru
      _
    // Predicated region
    $region46: #{tpu_custom_call.1} parent=1 // pred_check
      _
    $region47: #{tpu_custom_call.1} parent=1 // pred_check_branch
      %465 = sbr.rel (0) target = $region49
    $region48: #{tpu_custom_call.1} parent=1 // pred_region
      %466 = dma.done [#allocation4], 128
    $region49: #{tpu_custom_call.1} parent=1 // pred_fallthru
      _
    %467 = vsyncpa [#allocation3], 1
    %468 = vsyncpa [#allocation6], 1
    %469 = vsyncpa [#allocation9], 1
    %470 = vsyncpa [#allocation4], 1

</llo_original>
